<compile_context>
chip_gen: v6e
topology: v6e:2x2x1
jax: 0.10.0
libtpu: 0.0.40
codegen_flags: <defaults>
</compile_context>

<pallas_src>
import functools

import jax
import jax.numpy as jnp
from jax.experimental import pallas as pl
from jax.experimental.pallas import tpu as pltpu


def _my_attention_kernel(w_ref, b_ref, x_ref, o_ref, *scratch, k, C, H, W):
    """out[h,w] = relu(b + sum_{c,di,dj} x[c, h+di-p, w+dj-p] * wgt[c,di,dj])."""
    p = k // 2
    acc = jnp.full((H, W), b_ref[0], dtype=jnp.float32)

    if p == 0:
        # 1x1 conv: pure per-channel scalar * plane accumulation, no halo,
        # no scratch copy.
        for c in range(C):
            acc = acc + x_ref[0, c] * w_ref[c]
    else:
        xpad_ref = scratch[0]
        # Zero halo + interior, then drop this batch element's (C, H, W) tile
        # into the interior (in-kernel zero padding; nothing re-read from HBM).
        xpad_ref[...] = jnp.zeros_like(xpad_ref)
        for c in range(C):
            xpad_ref[c, pl.ds(p, H), pl.ds(p, W)] = x_ref[0, c]
        # Shifted-slice accumulation == in-kernel im2col, but the output keeps
        # the spatial W axis in the lane dimension (lane-dense loads/stores).
        for c in range(C):
            for di in range(k):
                for dj in range(k):
                    wv = w_ref[(c * k + di) * k + dj]          # SMEM scalar weight
                    acc = acc + xpad_ref[c, pl.ds(di, H), pl.ds(dj, W)] * wv

    o_ref[0] = jnp.maximum(acc, 0.0)                            # fused ReLU


@jax.jit
def my_attention(x, weight, bias):
    """x: (N, C, H, W); weight: (1, C, k, k); bias: (1,) -> (N, 1, H, W)."""
    n, c, h, w = x.shape
    k = weight.shape[-1]
    p = k // 2

    w_flat = weight.astype(jnp.float32).reshape(-1)   # (C*k*k,) in (c,di,dj) order
    b_flat = bias.astype(jnp.float32).reshape(1)

    kernel = functools.partial(_my_attention_kernel, k=k, C=c, H=h, W=w)
    scratch_shapes = []
    if p > 0:
        scratch_shapes = [pltpu.VMEM((c, h + 2 * p, w + 2 * p), jnp.float32)]

    smem_spec = pl.BlockSpec(memory_space=pltpu.MemorySpace.SMEM)
    out = pl.pallas_call(
        kernel,
        out_shape=jax.ShapeDtypeStruct((n, h, w), jnp.float32),
        grid_spec=pltpu.PrefetchScalarGridSpec(
            num_scalar_prefetch=0,
            grid=(n,),
            in_specs=[smem_spec,                         # conv weights -> SMEM
                      smem_spec,                         # bias        -> SMEM
                      pl.BlockSpec((1, c, h, w), lambda i: (i, 0, 0, 0))],
            out_specs=pl.BlockSpec((1, h, w), lambda i: (i, 0, 0)),
            scratch_shapes=scratch_shapes),
        compiler_params=pltpu.CompilerParams(
            dimension_semantics=("parallel",)),
    )(w_flat, b_flat, x.astype(jnp.float32))
    return out.reshape(n, 1, h, w)


def my_attention_ref(x, weight, bias):
    """Pure-JAX reference (PyTorch Conv2d(padding=k//2) + ReLU semantics)."""
    k = weight.shape[-1]
    p = k // 2
    y = jax.lax.conv_general_dilated(
        x.astype(jnp.float32), weight.astype(jnp.float32),
        window_strides=(1, 1), padding=[(p, p), (p, p)],
        dimension_numbers=("NCHW", "OIHW", "NCHW"),
        precision=jax.lax.Precision.HIGHEST)
    return jax.nn.relu(y + bias.reshape(1, 1, 1, 1))


if __name__ == "__main__":
    key = jax.random.PRNGKey(0)
    kx, kw1, kb1, kw3, kb3 = jax.random.split(key, 5)

    N, C, H, W = 2, 4, 16, 16
    x = jax.random.normal(kx, (N, C, H, W), jnp.float32)

    # Exercise both the default kernel_size=1 and a padded kernel_size=3.
    for ksz, kw, kb in ((1, kw1, kb1), (3, kw3, kb3)):
        weight = 0.1 * jax.random.normal(kw, (1, C, ksz, ksz), jnp.float32)
        bias = 0.1 * jax.random.normal(kb, (1,), jnp.float32)

        out = my_attention(x, weight, bias)
        out = jax.block_until_ready(out)
        assert out.shape == (N, 1, H, W), out.shape
        assert bool(jnp.all(out >= 0.0))

        ref = my_attention_ref(x, weight, bias)
        err = float(jnp.max(jnp.abs(out - ref)))
        assert err < 1e-3, f"kernel_size={ksz} max abs err {err}"

    print("KERNEL_OK")
</pallas_src>

<mosaic_0001>
module attributes {stable_mosaic.version = 11 : i64} {
  func.func @_my_attention_kernel(%arg0: i32, %arg1: memref<4xf32, #tpu.memory_space<smem>>, %arg2: memref<1xf32, #tpu.memory_space<smem>>, %arg3: memref<1x4x16x16xf32, #tpu.memory_space<vmem>>, %arg4: memref<1x16x16xf32, #tpu.memory_space<vmem>>) attributes {dimension_semantics = [#tpu.dimension_semantics<parallel>], iteration_bounds = array<i64: 2>, scalar_prefetch = 0 : i64, scratch_operands = 0 : i64, tpu.core_type = #tpu.core_type<tc>, window_params = [{transform_indices = @transform_0, window_bounds = array<i64: 4>}, {transform_indices = @transform_1, window_bounds = array<i64: 1>}, {transform_indices = @transform_2, window_bounds = array<i64: 1, 4, 16, 16>}, {transform_indices = @transform_3, window_bounds = array<i64: 1, 16, 16>}]} {
    %c0 = arith.constant 0 : index
    %0 = memref.load %arg2[%c0] : memref<1xf32, #tpu.memory_space<smem>>
    %1 = vector.broadcast %0 : f32 to vector<16x16xf32>
    %c0_0 = arith.constant 0 : index
    %c0_1 = arith.constant 0 : index
    %c0_2 = arith.constant 0 : index
    %c0_3 = arith.constant 0 : index
    %2 = vector.load %arg3[%c0_0, %c0_1, %c0_2, %c0_3] : memref<1x4x16x16xf32, #tpu.memory_space<vmem>>, vector<1x1x16x16xf32>
    %3 = vector.shape_cast %2 : vector<1x1x16x16xf32> to vector<16x16xf32>
    %c0_4 = arith.constant 0 : index
    %4 = memref.load %arg1[%c0_4] : memref<4xf32, #tpu.memory_space<smem>>
    %5 = vector.broadcast %4 : f32 to vector<16x16xf32>
    %6 = arith.mulf %3, %5 : vector<16x16xf32>
    %7 = arith.addf %1, %6 : vector<16x16xf32>
    %c0_5 = arith.constant 0 : index
    %c1 = arith.constant 1 : index
    %c0_6 = arith.constant 0 : index
    %c0_7 = arith.constant 0 : index
    %8 = vector.load %arg3[%c0_5, %c1, %c0_6, %c0_7] : memref<1x4x16x16xf32, #tpu.memory_space<vmem>>, vector<1x1x16x16xf32>
    %9 = vector.shape_cast %8 : vector<1x1x16x16xf32> to vector<16x16xf32>
    %c1_8 = arith.constant 1 : index
    %10 = memref.load %arg1[%c1_8] : memref<4xf32, #tpu.memory_space<smem>>
    %11 = vector.broadcast %10 : f32 to vector<16x16xf32>
    %12 = arith.mulf %9, %11 : vector<16x16xf32>
    %13 = arith.addf %7, %12 : vector<16x16xf32>
    %c0_9 = arith.constant 0 : index
    %c2 = arith.constant 2 : index
    %c0_10 = arith.constant 0 : index
    %c0_11 = arith.constant 0 : index
    %14 = vector.load %arg3[%c0_9, %c2, %c0_10, %c0_11] : memref<1x4x16x16xf32, #tpu.memory_space<vmem>>, vector<1x1x16x16xf32>
    %15 = vector.shape_cast %14 : vector<1x1x16x16xf32> to vector<16x16xf32>
    %c2_12 = arith.constant 2 : index
    %16 = memref.load %arg1[%c2_12] : memref<4xf32, #tpu.memory_space<smem>>
    %17 = vector.broadcast %16 : f32 to vector<16x16xf32>
    %18 = arith.mulf %15, %17 : vector<16x16xf32>
    %19 = arith.addf %13, %18 : vector<16x16xf32>
    %c0_13 = arith.constant 0 : index
    %c3 = arith.constant 3 : index
    %c0_14 = arith.constant 0 : index
    %c0_15 = arith.constant 0 : index
    %20 = vector.load %arg3[%c0_13, %c3, %c0_14, %c0_15] : memref<1x4x16x16xf32, #tpu.memory_space<vmem>>, vector<1x1x16x16xf32>
    %21 = vector.shape_cast %20 : vector<1x1x16x16xf32> to vector<16x16xf32>
    %c3_16 = arith.constant 3 : index
    %22 = memref.load %arg1[%c3_16] : memref<4xf32, #tpu.memory_space<smem>>
    %23 = vector.broadcast %22 : f32 to vector<16x16xf32>
    %24 = arith.mulf %21, %23 : vector<16x16xf32>
    %25 = arith.addf %19, %24 : vector<16x16xf32>
    %cst = arith.constant 0.000000e+00 : f32
    %26 = vector.broadcast %cst : f32 to vector<16x16xf32>
    %27 = arith.maximumf %25, %26 : vector<16x16xf32>
    %c0_17 = arith.constant 0 : index
    %c0_18 = arith.constant 0 : index
    %c0_19 = arith.constant 0 : index
    %28 = vector.load %arg4[%c0_17, %c0_18, %c0_19] : memref<1x16x16xf32, #tpu.memory_space<vmem>>, vector<1x16x16xf32>
    %29 = vector.shape_cast %28 : vector<1x16x16xf32> to vector<16x16xf32>
    %30 = vector.shape_cast %27 : vector<16x16xf32> to vector<1x16x16xf32>
    tpu.vector_store %arg4[%c0_17, %c0_18, %c0_19], %30 {strides = array<i32>} : memref<1x16x16xf32, #tpu.memory_space<vmem>>, vector<1x16x16xf32>,
    return
  }
  func.func @transform_0(%arg0: i32) -> i32 {
    %c0_i32 = arith.constant 0 : i32
    %c0_i32_0 = arith.constant 0 : i32
    return %c0_i32 : i32
  }
  func.func @transform_1(%arg0: i32) -> i32 {
    %c0_i32 = arith.constant 0 : i32
    %c0_i32_0 = arith.constant 0 : i32
    return %c0_i32 : i32
  }
  func.func @transform_2(%arg0: i32) -> (i32, i32, i32, i32) {
    %c0_i32 = arith.constant 0 : i32
    %c0_i32_0 = arith.constant 0 : i32
    %c0_i32_1 = arith.constant 0 : i32
    %c0_i32_2 = arith.constant 0 : i32
    return %arg0, %c0_i32, %c0_i32_0, %c0_i32_1 : i32, i32, i32, i32
  }
  func.func @transform_3(%arg0: i32) -> (i32, i32, i32) {
    %c0_i32 = arith.constant 0 : i32
    %c0_i32_0 = arith.constant 0 : i32
    %c0_i32_1 = arith.constant 0 : i32
    return %arg0, %c0_i32, %c0_i32_0 : i32, i32, i32
  }
}

</mosaic_0001>

<llo_original>
// kernel: my_attention.1
$region0: #{my_attention.1}
  #allocation0 [shape = 'u32[]', space=smem, size = 0x4, offset = 0x4, fixed_abs, tag = 'smem constant byte address 0x4 - core index']
  #allocation1 [shape = 'u32[144,128]{1,0:T(1,128)}', space=vmem, size = 0x12000, scoped, tag = 'internal scratch']
  #allocation2 [shape = 'f32[1]{0:T(128)S(6)}', space=smem, size = 0x200, scoped, tag = 'scoped memory for my_attention.1']
  %s0 = inlined_call_operand.vmem [shape: f32[4], index: 0, kind: input, shape index: {}]
  %s1 = inlined_call_operand.<no memory space> [shape: f32[1], index: 1, kind: input, shape index: {}]
  %s2 = inlined_call_operand.hbm [shape: f32[2,4,16,16], index: 2, kind: input, shape index: {}]
  %s3 = inlined_call_operand.hbm [shape: f32[2,16,16], index: 3, kind: output, shape index: {}]
  %s4 = sld [smem:[#allocation0]]
  $region53: #{my_attention.1} parent=0
    _
  %s6 = ssub.s32 1, %s4
  %s7 = scalar_select 0, %s6, %s4
  %8 = sst [smem:[#allocation2]] %s1
  $region1: #{my_attention.1} parent=0
    #allocation3 [shape = 'u8[512]{0}', space=smem, size = 0x200, scoped, tag = 'input window, operand 0, single buffered']
    #allocation4 [shape = 's32[2]{0}', space=sflag, size = 0x8, scoped, tag = 'scoped memory for my_attention.1']
    #allocation5 [shape = 's32[2]{0}', space=sflag, size = 0x8, scoped, tag = 'scoped memory for my_attention.1']
    #allocation6 [shape = 's32[2]{0}', space=sflag, size = 0x8, scoped, tag = 'scoped memory for my_attention.1']
    #allocation7 [shape = 'u8[65536]{0}', space=vmem, size = 0x10000, scoped, tag = 'input window, operand 2']
    #allocation8 [shape = 'u8[16384]{0}', space=vmem, size = 0x4000, scoped, tag = 'output window, operand 0']
    %9 = vsyncpa [#allocation6], 0
    %10 = vsyncpa [#allocation4], 0
    %s11 = scalar_lea.sflag [#allocation4], 1
    %12 = vsyncpa %s11, 0
    %13 = vsyncpa [#allocation5], 0
    %s14 = scalar_lea.sflag [#allocation5], 1
    %15 = vsyncpa %s14, 0
    loop: start=0, step=1, limit=4
    $region2: #{my_attention.1} parent=1 // loop_pre_header
      _
    $region3: #{my_attention.1} parent=1 // loop_header
      %s17 = sphi 0, %s21
      %p18 = scmp.ge.s32.totalorder %s17, 4
      %s25 = sphi 0, %s25
      %s27 = sphi 0, %s25
      %s28 = sphi 0, %s27
      %s42 = sphi 0, %s28
      %s46 = sphi 0, %s46
      %s48 = sphi 0, %s46
      %s49 = sphi 0, %s48
      %s63 = sphi 0, %s49
      %s69 = sphi 0, %s71
      %s72 = sphi 0, %s69
      %s73 = sphi 0, %s72
      %s89 = sphi 0, %s73
      %s95 = sphi 0, %s97
      %s98 = sphi 0, %s95
      %s99 = sphi 0, %s98
      %s115 = sphi 0, %s99
    $region4: #{my_attention.1} parent=1 // loop_header_branch
      %20 = sbr.rel (%p18) target = $region8
    $region5: #{my_attention.1} parent=1 // loop_body
      %s22 = ssub.s32 %s17, 1
      %s23 = ssub.s32 %s17, 2
      %s24 = sadd.s32 %s17, 1
      %s26 = sadd.s32 %s25, 1
      %p29 = scmp.eq.s32.totalorder %s17, 1
      %p30 = scmp.ne.s32.totalorder %s25, %s27
      %p31 = scmp.eq.s32.totalorder %s17, 0
      %p32 = por %p30, %p31
      %p33 = scmp.ne.s32.totalorder %s25, %s27
      %p34 = scmp.eq.s32.totalorder %s22, 1
      %p35 = por %p33, %p34
      %p36 = scmp.ne.s32.totalorder %s27, %s28
      %p37 = scmp.eq.s32.totalorder %s22, 0
      %p38 = por %p36, %p37
      %p39 = scmp.ne.s32.totalorder %s27, %s28
      %p40 = scmp.eq.s32.totalorder %s23, 1
      %p41 = por %p39, %p40
      %p43 = scmp.ne.s32.totalorder %s28, %s42
      %p44 = scmp.eq.s32.totalorder %s23, 0
      %p45 = por %p43, %p44
      %s47 = sadd.s32 %s46, 1
      %p50 = scmp.eq.s32.totalorder %s17, 1
      %p51 = scmp.ne.s32.totalorder %s46, %s48
      %p52 = scmp.eq.s32.totalorder %s17, 0
      %p53 = por %p51, %p52
      %p54 = scmp.ne.s32.totalorder %s46, %s48
      %p55 = scmp.eq.s32.totalorder %s22, 1
      %p56 = por %p54, %p55
      %p57 = scmp.ne.s32.totalorder %s48, %s49
      %p58 = scmp.eq.s32.totalorder %s22, 0
      %p59 = por %p57, %p58
      %p60 = scmp.ne.s32.totalorder %s48, %s49
      %p61 = scmp.eq.s32.totalorder %s23, 1
      %p62 = por %p60, %p61
      %p64 = scmp.ne.s32.totalorder %s49, %s63
      %p65 = scmp.eq.s32.totalorder %s23, 0
      %p66 = por %p64, %p65
      %s67 = ssub.s32 %s17, %s24
      %p68 = scmp.eq.s32.totalorder %s67, 0
      %s70 = sadd.s32 %s69, 1
      %s71 = scalar_select %p68, %s69, %s70
      %p74 = pneg %p68
      %p75 = scmp.eq.s32.totalorder %s17, 1
      %p76 = por %p74, %p75
      %p77 = scmp.ne.s32.totalorder %s69, %s72
      %p78 = scmp.eq.s32.totalorder %s17, 0
      %p79 = por %p77, %p78
      %p80 = scmp.ne.s32.totalorder %s69, %s72
      %p81 = scmp.eq.s32.totalorder %s22, 1
      %p82 = por %p80, %p81
      %p83 = scmp.ne.s32.totalorder %s72, %s73
      %p84 = scmp.eq.s32.totalorder %s22, 0
      %p85 = por %p83, %p84
      %p86 = scmp.ne.s32.totalorder %s72, %s73
      %p87 = scmp.eq.s32.totalorder %s23, 1
      %p88 = por %p86, %p87
      %p90 = scmp.ne.s32.totalorder %s73, %s89
      %p91 = scmp.eq.s32.totalorder %s23, 0
      %p92 = por %p90, %p91
      %s93 = ssub.s32 %s17, %s24
      %p94 = scmp.eq.s32.totalorder %s93, 0
      %s96 = sadd.s32 %s95, 1
      %s97 = scalar_select %p94, %s95, %s96
      %p100 = pneg %p94
      %p101 = scmp.eq.s32.totalorder %s17, 1
      %p102 = por %p100, %p101
      %p103 = scmp.ne.s32.totalorder %s95, %s98
      %p104 = scmp.eq.s32.totalorder %s17, 0
      %p105 = por %p103, %p104
      %p106 = scmp.ne.s32.totalorder %s95, %s98
      %p107 = scmp.eq.s32.totalorder %s22, 1
      %p108 = por %p106, %p107
      %p109 = scmp.ne.s32.totalorder %s98, %s99
      %p110 = scmp.eq.s32.totalorder %s22, 0
      %p111 = por %p109, %p110
      %p112 = scmp.ne.s32.totalorder %s98, %s99
      %p113 = scmp.eq.s32.totalorder %s23, 1
      %p114 = por %p112, %p113
      %p116 = scmp.ne.s32.totalorder %s99, %s115
      %p117 = scmp.eq.s32.totalorder %s23, 0
      %p118 = por %p116, %p117
      %p119 = scmp.le.s32.totalorder 1, %s17
      %p120 = scmp.lt.s32.totalorder %s17, 3
      %p121 = pnand %p119, %p120
      %p122 = pneg %p121
      // Predicated region
      $region9: #{my_attention.1} parent=5 // pred_check
        _
      $region10: #{my_attention.1} parent=5 // pred_check_branch
        %124 = sbr.rel (%p121) target = $region12
      $region11: #{my_attention.1} parent=5 // pred_region
        %s125 = ssub.s32 %s17, 1
        // Predicated region
        $region13: #{my_attention.1} parent=11 // pred_check
          %p126 = pneg %p38
        $region14: #{my_attention.1} parent=11 // pred_check_branch
          %128 = sbr.rel (%p126) target = $region16
        $region15: #{my_attention.1} parent=11 // pred_region
          %s130 = ssub.s32 16, 16
          %131 = vsyncadd [#allocation6], %s130
          %s133 = sshll.u32 %s0, 4
          %s134 = int_to_ptr.vmem [resolvable:$true] %s133
          %136 = dma.vmem_to_smem %s134, 16, [#allocation3], [#allocation6]
        $region16: #{my_attention.1} parent=11 // pred_fallthru
          _
        // Predicated region
        $region17: #{my_attention.1} parent=11 // pred_check
          %p137 = pneg %p59
        $region18: #{my_attention.1} parent=11 // pred_check_branch
          %139 = sbr.rel (%p137) target = $region20
        $region19: #{my_attention.1} parent=11 // pred_region
          _
        $region20: #{my_attention.1} parent=11 // pred_fallthru
          _
      $region12: #{my_attention.1} parent=5 // pred_fallthru
        _
      %p140 = scmp.lt.s32.totalorder %s17, 2
      // Predicated region
      $region21: #{my_attention.1} parent=5 // pred_check
        %p141 = pneg %p140
      $region22: #{my_attention.1} parent=5 // pred_check_branch
        %143 = sbr.rel (%p141) target = $region24
      $region23: #{my_attention.1} parent=5 // pred_region
        // Predicated region
        $region25: #{my_attention.1} parent=23 // pred_check
          %p144 = pneg %p79
        $region26: #{my_attention.1} parent=23 // pred_check_branch
          %146 = sbr.rel (%p144) target = $region28
        $region27: #{my_attention.1} parent=23 // pred_region
          %s147 = sand.u32 %s69, 1
          %s148 = scalar_lea.sflag [#allocation4], %s147
          %s149 = sand.u32 %s69, 1
          %s150 = smul.addr %s149, 64
          %s151 = scalar_lea.vmem [#allocation7], %s150
          %s153 = ssub.s32 1024, 1024
          %154 = vsyncadd %s148, %s153
          %s155 = smul.addr %s17, 8
          %s156 = smul.addr %s155, 128
          %s157 = scalar_lea.hbm %s2, %s156
          %s158 = sshll.u32 %s151, 4
          %s159 = int_to_ptr.vmem [resolvable:$true] %s158
          %164 = dma.hbm_to_vmem [thread:$0]  %s157, 1024, %s159, %s148, 128, 128, 8
        $region28: #{my_attention.1} parent=23 // pred_fallthru
          _
      $region24: #{my_attention.1} parent=5 // pred_fallthru
        _
      %p165 = scmp.le.s32.totalorder 1, %s17
      %p166 = scmp.lt.s32.totalorder %s17, 3
      %p167 = pnand %p165, %p166
      %p168 = pneg %p167
      // Predicated region
      $region29: #{my_attention.1} parent=5 // pred_check
        _
      $region30: #{my_attention.1} parent=5 // pred_check_branch
        %170 = sbr.rel (%p167) target = $region32
      $region31: #{my_attention.1} parent=5 // pred_region
        %s171 = ssub.s32 %s17, 1
        // Predicated region
        $region33: #{my_attention.1} parent=31 // pred_check
          %p172 = pneg %p38
        $region34: #{my_attention.1} parent=31 // pred_check_branch
          %174 = sbr.rel (%p172) target = $region36
        $region35: #{my_attention.1} parent=31 // pred_region
          %175 = dma.done [#allocation6], 16
        $region36: #{my_attention.1} parent=31 // pred_fallthru
          _
        %s176 = sand.u32 %s72, 1
        %s177 = scalar_lea.sflag [#allocation4], %s176
        %s178 = sand.u32 %s72, 1
        %s179 = smul.addr %s178, 64
        %s180 = scalar_lea.vmem [#allocation7], %s179
        // Predicated region
        $region37: #{my_attention.1} parent=31 // pred_check
          %p181 = pneg %p85
        $region38: #{my_attention.1} parent=31 // pred_check_branch
          %183 = sbr.rel (%p181) target = $region40
        $region39: #{my_attention.1} parent=31 // pred_region
          %184 = dma.done %s177, 1024
        $region40: #{my_attention.1} parent=31 // pred_fallthru
          _
        %185 = sfence
        %p186 = pneg %p38
        %p187 = pneg %p35
        %p188 = pneg %p59
        %p189 = pneg %p56
        %s190 = sand.u32 %s72, 1
        %s191 = scalar_lea.sflag [#allocation4], %s190
        %s192 = sand.u32 %s72, 1
        %s193 = smul.addr %s192, 64
        %s194 = scalar_lea.vmem [#allocation7], %s193
        %p195 = pneg %p85
        %p196 = pneg %p82
        %p197 = pneg %p111
        %p198 = pneg %p108
        %s199 = sand.u32 %s98, 1
        %s200 = scalar_lea.sflag [#allocation5], %s199
        %s201 = sand.u32 %s98, 1
        %s202 = smul.addr %s201, 16
        %s203 = scalar_lea.vmem [#allocation8], %s202
        %s204 = sld [smem:[#allocation2]]
        %v205 = vstv %s204
        %v206 = vld [vmem:[%s180] sm:$0xff]
        %v207 = vld [vmem:[%s180 + $0x8] sm:$0xff]
        %s208 = sld [smem:[#allocation3]]
        %v209 = vstv %s208
        %v210 = vmul.f32 %v206, %v209
        %v211 = vmul.f32 %v207, %v209
        %v212 = vadd.f32 %v205, %v210
        %v213 = vadd.f32 %v205, %v211
        %s214 = scalar_lea.vmem %s180, 16 [#allocation7]
        %v215 = vld [vmem:[%s214] sm:$0xff]
        %v216 = vld [vmem:[%s214 + $0x8] sm:$0xff]
        %s217 = sld [smem:[#allocation3 + $0x1]]
        %v218 = vstv %s217
        %v219 = vmul.f32 %v215, %v218
        %v220 = vmul.f32 %v216, %v218
        %v221 = vadd.f32 %v212, %v219
        %v222 = vadd.f32 %v213, %v220
        %s223 = scalar_lea.vmem %s180, 32 [#allocation7]
        %v224 = vld [vmem:[%s223] sm:$0xff]
        %v225 = vld [vmem:[%s223 + $0x8] sm:$0xff]
        %s226 = sld [smem:[#allocation3 + $0x2]]
        %v227 = vstv %s226
        %v228 = vmul.f32 %v224, %v227
        %v229 = vmul.f32 %v225, %v227
        %v230 = vadd.f32 %v221, %v228
        %v231 = vadd.f32 %v222, %v229
        %s232 = scalar_lea.vmem %s180, 48 [#allocation7]
        %v233 = vld [vmem:[%s232] sm:$0xff]
        %v234 = vld [vmem:[%s232 + $0x8] sm:$0xff]
        %s235 = sld [smem:[#allocation3 + $0x3]]
        %v236 = vstv %s235
        %v237 = vmul.f32 %v233, %v236
        %v238 = vmul.f32 %v234, %v236
        %v239 = vadd.f32 %v230, %v237
        %v240 = vadd.f32 %v231, %v238
        %v241 = vmax.f32 %v239, 0.0
        %v242 = vmax.f32 %v240, 0.0
        %vm243 = vcmask 130048
        %244 = vst.msk [vmem:[%s203] sm:$0xff] %vm243, %v241
        %245 = vst.msk [vmem:[%s203 + $0x8] sm:$0xff] %vm243, %v242
        %s246 = sand.u32 %s98, 1
        %s247 = scalar_lea.sflag [#allocation5], %s246
        %s248 = sand.u32 %s98, 1
        %s249 = smul.addr %s248, 16
        %s250 = scalar_lea.vmem [#allocation8], %s249
        // Predicated region
        $region41: #{my_attention.1} parent=31 // pred_check
          %p251 = pneg %p108
        $region42: #{my_attention.1} parent=31 // pred_check_branch
          %253 = sbr.rel (%p251) target = $region44
        $region43: #{my_attention.1} parent=31 // pred_region
          %s255 = ssub.s32 256, 256
          %256 = vsyncadd %s247, %s255
          %s257 = smul.addr %s22, 2
          %s258 = smul.addr %s257, 128
          %s259 = scalar_lea.hbm %s3, %s258
          %s260 = sshll.u32 %s250, 4
          %s261 = int_to_ptr.vmem [resolvable:$true] %s260
          %266 = dma.vmem_to_hbm [thread:$0]  %s261, 256, %s259, %s247, 128, 128, 8
        $region44: #{my_attention.1} parent=31 // pred_fallthru
          _
      $region32: #{my_attention.1} parent=5 // pred_fallthru
        _
      %p267 = scmp.le.s32.totalorder 2, %s17
      // Predicated region
      $region45: #{my_attention.1} parent=5 // pred_check
        %p268 = pneg %p267
      $region46: #{my_attention.1} parent=5 // pred_check_branch
        %270 = sbr.rel (%p268) target = $region48
      $region47: #{my_attention.1} parent=5 // pred_region
        %s271 = ssub.s32 %s17, 2
        // Predicated region
        $region49: #{my_attention.1} parent=47 // pred_check
          %p272 = pneg %p114
        $region50: #{my_attention.1} parent=47 // pred_check_branch
          %274 = sbr.rel (%p272) target = $region52
        $region51: #{my_attention.1} parent=47 // pred_region
          %s275 = sand.u32 %s99, 1
          %s276 = scalar_lea.sflag [#allocation5], %s275
          %s277 = sand.u32 %s99, 1
          %s278 = smul.addr %s277, 16
          %s279 = scalar_lea.vmem [#allocation8], %s278
          %280 = dma.done %s276, 256
        $region52: #{my_attention.1} parent=47 // pred_fallthru
          _
      $region48: #{my_attention.1} parent=5 // pred_fallthru
        _
    $region6: #{my_attention.1} parent=1 // loop_footer
      %s21 = sadd.s32 1, %s17
    $region7: #{my_attention.1} parent=1 // loop_footer_branch
      %16 = sbr.rel target = $region3
    $region8: #{my_attention.1} parent=1 // loop_exit
      _
    %281 = vsyncpa [#allocation4], 1
    %s282 = scalar_lea.sflag [#allocation4], 1
    %283 = vsyncpa %s282, 1
    %284 = vsyncpa [#allocation5], 1
    %s285 = scalar_lea.sflag [#allocation5], 1
    %286 = vsyncpa %s285, 1
    %287 = vsyncpa [#allocation6], 1
    %s288 = scalar_lea.sflag [#allocation6], 1
    %289 = vsyncpa %s288, 1

</llo_original>
